<compile_context>
chip_gen: v6e
topology: v6e:2x2x1
jax: 0.10.0
libtpu: 0.0.40
codegen_flags: <defaults>
</compile_context>

<pallas_src>
import jax
import jax.numpy as jnp
from jax.experimental import pallas as pl
from jax.experimental.pallas import tpu as pltpu


_LANE = 1024                    # lane-dense last dim (multiple of 128)
_MIN_PALLAS_BYTES = 256 * 1024  # below this, plain jnp is faster (fusable, no call overhead)


def _diff_kernel(a_ref, b_ref, o_ref):
    # Pure VPU elementwise subtract on the current (TR, _LANE) VMEM tile.
    # Explicit cast keeps the mixed-dtype case (out = result_type(a, b)) robust.
    o_ref[...] = (a_ref[...] - b_ref[...]).astype(o_ref.dtype)


def _round_up(x, m):
    return (x + m - 1) // m * m


def difference_pallas(a: jax.Array, b: jax.Array, *, force: bool = False) -> jax.Array:
    """Compute `a - b` (NumPy/PyTorch broadcasting) with a Pallas TPU kernel."""
    out_shape = jnp.broadcast_shapes(a.shape, b.shape)
    out_dtype = jnp.result_type(a.dtype, b.dtype)

    n_elems = 1
    for d in out_shape:
        n_elems *= d
    out_itemsize = jnp.dtype(out_dtype).itemsize

    # Tiny / empty tensors: skip Pallas entirely (strictly faster + fusable).
    if n_elems == 0 or (not force and n_elems * out_itemsize < _MIN_PALLAS_BYTES):
        return (a - b).astype(out_dtype)

    a_b = jnp.broadcast_to(a, out_shape)
    b_b = jnp.broadcast_to(b, out_shape)

    # ---- lane-dense flattening: view everything as (rows, _LANE) -----------
    itemsizes = (jnp.dtype(a.dtype).itemsize, jnp.dtype(b.dtype).itemsize, out_itemsize)
    min_item = max(1, min(itemsizes))
    max_item = max(1, max(itemsizes))
    # Sub-32-bit dtypes pack along sublanes: keep the row count / row tile a
    # multiple of 8 (f32) / 16 (bf16) / 32 (int8).
    sub_mult = max(8, 32 // min_item)

    n_rows = pl.cdiv(n_elems, _LANE)
    n_rows_padded = _round_up(n_rows, sub_mult)
    padded_elems = n_rows_padded * _LANE

    def _as_2d(arr):
        flat = arr.reshape(-1)
        if padded_elems != n_elems:
            flat = jnp.pad(flat, (0, padded_elems - n_elems))
        return flat.reshape(n_rows_padded, _LANE)

    a2 = _as_2d(a_b)
    b2 = _as_2d(b_b)

    # Row tile: ~2 MiB for the widest operand => <= ~12 MiB live in VMEM with
    # double buffering (2 inputs + 1 output), safe for v7x's 64 MiB VMEM /
    # 32 MiB scoped default, and well past the DMA-amortization knee.
    tr = max(sub_mult, ((2 * 1024 * 1024) // (_LANE * max_item)) // sub_mult * sub_mult)
    tr = min(tr, n_rows_padded)
    grid = (pl.cdiv(n_rows_padded, tr),)

    # Note: if the caller donates x[0]['input'], input_output_aliases={0: 0}
    # could reuse its HBM buffer; left off since donation isn't guaranteed here.
    out2d = pl.pallas_call(
        _diff_kernel,
        out_shape=jax.ShapeDtypeStruct((n_rows_padded, _LANE), out_dtype),
        grid=grid,
        in_specs=[
            pl.BlockSpec((tr, _LANE), lambda i: (i, 0)),
            pl.BlockSpec((tr, _LANE), lambda i: (i, 0)),
        ],
        out_specs=pl.BlockSpec((tr, _LANE), lambda i: (i, 0)),
        # Independent row axis -> "parallel" lets v7x shard across its 2 TCs
        # (harmless on single-TC v5e/v6e).
        compiler_params=pltpu.CompilerParams(
            dimension_semantics=("parallel",),
        ),
    )(a2, b2)

    out = out2d.reshape(-1)
    if padded_elems != n_elems:
        out = out[:n_elems]
    return out.reshape(out_shape)


def difference_aggregator(x):
    """Port of Difference.forward: x is a list of exactly 2 dicts."""
    if not len(x) == 2:
        raise ValueError(
            "Difference Aggregator needs exactly 2 inputs, but received "
            "{}".format(len(x))
        )
    output = dict()
    output["adj"] = x[-1]["adj"]
    output["adj_wts"] = x[-1].get("adj_wts", None)
    output["nan_idx"] = x[-1].get("nan_idx", None)

    dim = x[0]["input"].shape[-1]
    for inp in x:
        if not inp["input"].shape[-1] == dim:
            raise ValueError(
                "For Difference Aggregator, the two input dimensions must "
                "match in last dimension"
            )
    output["input"] = difference_pallas(x[0]["input"], x[1]["input"])
    return output


if __name__ == "__main__":
    key = jax.random.PRNGKey(0)
    k0, k1, k2, k3, k4, k5 = jax.random.split(key, 6)

    # --- small demo shape consistent with the module ------------------------
    batch, nodes, hidden = 2, 8, 32
    in0 = jax.random.normal(k0, (batch, nodes, hidden), dtype=jnp.float32)
    in1 = jax.random.normal(k1, (batch, nodes, hidden), dtype=jnp.float32)
    adj = (jax.random.uniform(k2, (nodes, nodes)) > 0.5).astype(jnp.float32)

    x = [
        {"input": in0, "adj": adj},
        {"input": in1, "adj": adj},
    ]
    out = difference_aggregator(x)  # tiny -> jnp fast path inside the wrapper
    jax.block_until_ready(out["input"])
    ref = in0 - in1
    assert jnp.allclose(out["input"], ref, atol=1e-6), "aggregator mismatch vs reference"
    assert out["adj"] is adj
    assert out["adj_wts"] is None
    assert out["nan_idx"] is None

    # --- force the Pallas kernel at the small demo shape ---------------------
    out_k = difference_pallas(in0, in1, force=True)
    jax.block_until_ready(out_k)
    assert out_k.shape == ref.shape and out_k.dtype == ref.dtype
    assert jnp.allclose(out_k, ref, atol=1e-6), "forced Pallas path mismatch"

    # --- broadcasting + mixed dtype (PyTorch `-` semantics) through kernel ---
    in2 = jax.random.normal(k3, (1, nodes, hidden), dtype=jnp.bfloat16)
    out_b = difference_pallas(in0, in2, force=True)
    jax.block_until_ready(out_b)
    ref_b = in0 - in2
    assert out_b.shape == ref_b.shape and out_b.dtype == ref_b.dtype
    assert jnp.allclose(out_b, ref_b, atol=1e-5), "broadcast/mixed-dtype mismatch"

    # --- larger shape: natural Pallas path, multi-step grid + partial block --
    big0 = jax.random.normal(k4, (4, 640, 256), dtype=jnp.float32)
    big1 = jax.random.normal(k5, (4, 640, 256), dtype=jnp.float32)
    out_big = difference_pallas(big0, big1)
    jax.block_until_ready(out_big)
    assert jnp.allclose(out_big, big0 - big1, atol=1e-6), "tiled path mismatch"

    print("KERNEL_OK")
</pallas_src>

<mosaic_0001>
module attributes {stable_mosaic.version = 11 : i64} {
  func.func @_diff_kernel(%arg0: i32, %arg1: memref<8x1024xf32, #tpu.memory_space<vmem>>, %arg2: memref<8x1024xf32, #tpu.memory_space<vmem>>, %arg3: memref<8x1024xf32, #tpu.memory_space<vmem>>) attributes {dimension_semantics = [#tpu.dimension_semantics<parallel>], iteration_bounds = array<i64: 1>, scalar_prefetch = 0 : i64, scratch_operands = 0 : i64, tpu.core_type = #tpu.core_type<tc>, window_params = [{transform_indices = @transform_0, window_bounds = array<i64: 8, 1024>}, {transform_indices = @transform_1, window_bounds = array<i64: 8, 1024>}, {transform_indices = @transform_2, window_bounds = array<i64: 8, 1024>}]} {
    %c0 = arith.constant 0 : index
    %c0_0 = arith.constant 0 : index
    %0 = vector.load %arg1[%c0, %c0_0] : memref<8x1024xf32, #tpu.memory_space<vmem>>, vector<8x1024xf32>
    %c0_1 = arith.constant 0 : index
    %c0_2 = arith.constant 0 : index
    %1 = vector.load %arg2[%c0_1, %c0_2] : memref<8x1024xf32, #tpu.memory_space<vmem>>, vector<8x1024xf32>
    %2 = arith.subf %0, %1 : vector<8x1024xf32>
    %c0_3 = arith.constant 0 : index
    %c0_4 = arith.constant 0 : index
    %3 = vector.load %arg3[%c0_3, %c0_4] : memref<8x1024xf32, #tpu.memory_space<vmem>>, vector<8x1024xf32>
    tpu.vector_store %arg3[%c0_3, %c0_4], %2 {strides = array<i32>} : memref<8x1024xf32, #tpu.memory_space<vmem>>, vector<8x1024xf32>,
    return
  }
  func.func @transform_0(%arg0: i32) -> (i32, i32) {
    %c0_i32 = arith.constant 0 : i32
    %c0_i32_0 = arith.constant 0 : i32
    return %arg0, %c0_i32 : i32, i32
  }
  func.func @transform_1(%arg0: i32) -> (i32, i32) {
    %c0_i32 = arith.constant 0 : i32
    %c0_i32_0 = arith.constant 0 : i32
    return %arg0, %c0_i32 : i32, i32
  }
  func.func @transform_2(%arg0: i32) -> (i32, i32) {
    %c0_i32 = arith.constant 0 : i32
    %c0_i32_0 = arith.constant 0 : i32
    return %arg0, %c0_i32 : i32, i32
  }
}

</mosaic_0001>

<llo_original>
// kernel: tpu_custom_call.1
$region0: #{tpu_custom_call.1}
  #allocation0 [shape = 'u32[]', space=smem, size = 0x4, offset = 0x4, fixed_abs, tag = 'smem constant byte address 0x4 - core index']
  #allocation1 [shape = 'u32[144,128]{1,0:T(1,128)}', space=vmem, size = 0x12000, scoped, tag = 'internal scratch']
  %s0 = inlined_call_operand.hbm [shape: f32[8,1024], index: 0, kind: input, shape index: {}]
  %s1 = inlined_call_operand.hbm [shape: f32[8,1024], index: 1, kind: input, shape index: {}]
  %s2 = inlined_call_operand.hbm [shape: f32[8,1024], index: 2, kind: output, shape index: {}]
  %s3 = sld [smem:[#allocation0]]
  $region26: #{tpu_custom_call.1} parent=0
    _
  %s5 = ssub.s32 1, %s3
  %s6 = scalar_select 0, %s5, %s3
  $region1: #{tpu_custom_call.1} parent=0
    #allocation2 [shape = 'u8[32768]{0}', space=vmem, size = 0x8000, scoped, tag = 'input window, operand 0, single buffered']
    #allocation3 [shape = 's32[1]{0}', space=sflag, size = 0x4, scoped, tag = 'scoped memory for tpu_custom_call.1']
    #allocation4 [shape = 's32[1]{0}', space=sflag, size = 0x4, scoped, tag = 'scoped memory for tpu_custom_call.1']
    #allocation5 [shape = 'u8[32768]{0}', space=vmem, size = 0x8000, scoped, tag = 'input window, operand 1, single buffered']
    #allocation6 [shape = 's32[1]{0}', space=sflag, size = 0x4, scoped, tag = 'scoped memory for tpu_custom_call.1']
    #allocation7 [shape = 'u8[32768]{0}', space=vmem, size = 0x8000, scoped, tag = 'output window, operand 0, single buffered']
    %7 = vsyncpa [#allocation3], 0
    %8 = vsyncpa [#allocation6], 0
    %9 = vsyncpa [#allocation4], 0
    // Predicated region
    $region2: #{tpu_custom_call.1} parent=1 // pred_check
      _
    $region3: #{tpu_custom_call.1} parent=1 // pred_check_branch
      %11 = sbr.rel (0) target = $region5
    $region4: #{tpu_custom_call.1} parent=1 // pred_region
      %s13 = ssub.s32 1024, 1024
      %14 = vsyncadd [#allocation3], %s13
      %s16 = sshll.u32 [#allocation2], 4
      %s17 = int_to_ptr.vmem [resolvable:$true] %s16
      %19 = dma.hbm_to_vmem [thread:$0]  %s0, 1024, %s17, [#allocation3]
    $region5: #{tpu_custom_call.1} parent=1 // pred_fallthru
      _
    // Predicated region
    $region6: #{tpu_custom_call.1} parent=1 // pred_check
      _
    $region7: #{tpu_custom_call.1} parent=1 // pred_check_branch
      %21 = sbr.rel (0) target = $region9
    $region8: #{tpu_custom_call.1} parent=1 // pred_region
      %s23 = ssub.s32 1024, 1024
      %24 = vsyncadd [#allocation6], %s23
      %s26 = sshll.u32 [#allocation5], 4
      %s27 = int_to_ptr.vmem [resolvable:$true] %s26
      %29 = dma.hbm_to_vmem [thread:$0]  %s1, 1024, %s27, [#allocation6]
    $region9: #{tpu_custom_call.1} parent=1 // pred_fallthru
      _
    // Predicated region
    $region10: #{tpu_custom_call.1} parent=1 // pred_check
      _
    $region11: #{tpu_custom_call.1} parent=1 // pred_check_branch
      %31 = sbr.rel (0) target = $region13
    $region12: #{tpu_custom_call.1} parent=1 // pred_region
      %32 = dma.done [#allocation3], 1024
    $region13: #{tpu_custom_call.1} parent=1 // pred_fallthru
      _
    // Predicated region
    $region14: #{tpu_custom_call.1} parent=1 // pred_check
      _
    $region15: #{tpu_custom_call.1} parent=1 // pred_check_branch
      %34 = sbr.rel (0) target = $region17
    $region16: #{tpu_custom_call.1} parent=1 // pred_region
      %35 = dma.done [#allocation6], 1024
    $region17: #{tpu_custom_call.1} parent=1 // pred_fallthru
      _
    %v36 = vld [vmem:[#allocation2] sm:$0xff]
    %v37 = vld [vmem:[#allocation2 + $0x8] sm:$0xff]
    %v38 = vld [vmem:[#allocation2 + $0x10] sm:$0xff]
    %v39 = vld [vmem:[#allocation2 + $0x18] sm:$0xff]
    %v40 = vld [vmem:[#allocation2 + $0x20] sm:$0xff]
    %v41 = vld [vmem:[#allocation2 + $0x28] sm:$0xff]
    %v42 = vld [vmem:[#allocation2 + $0x30] sm:$0xff]
    %v43 = vld [vmem:[#allocation2 + $0x38] sm:$0xff]
    %v44 = vld [vmem:[#allocation5] sm:$0xff]
    %v45 = vld [vmem:[#allocation5 + $0x8] sm:$0xff]
    %v46 = vld [vmem:[#allocation5 + $0x10] sm:$0xff]
    %v47 = vld [vmem:[#allocation5 + $0x18] sm:$0xff]
    %v48 = vld [vmem:[#allocation5 + $0x20] sm:$0xff]
    %v49 = vld [vmem:[#allocation5 + $0x28] sm:$0xff]
    %v50 = vld [vmem:[#allocation5 + $0x30] sm:$0xff]
    %v51 = vld [vmem:[#allocation5 + $0x38] sm:$0xff]
    %v52 = vsub.f32 %v36, %v44
    %v53 = vsub.f32 %v37, %v45
    %v54 = vsub.f32 %v38, %v46
    %v55 = vsub.f32 %v39, %v47
    %v56 = vsub.f32 %v40, %v48
    %v57 = vsub.f32 %v41, %v49
    %v58 = vsub.f32 %v42, %v50
    %v59 = vsub.f32 %v43, %v51
    %60 = vst [vmem:[#allocation7] sm:$0xff] %v52
    %61 = vst [vmem:[#allocation7 + $0x8] sm:$0xff] %v53
    %62 = vst [vmem:[#allocation7 + $0x10] sm:$0xff] %v54
    %63 = vst [vmem:[#allocation7 + $0x18] sm:$0xff] %v55
    %64 = vst [vmem:[#allocation7 + $0x20] sm:$0xff] %v56
    %65 = vst [vmem:[#allocation7 + $0x28] sm:$0xff] %v57
    %66 = vst [vmem:[#allocation7 + $0x30] sm:$0xff] %v58
    %67 = vst [vmem:[#allocation7 + $0x38] sm:$0xff] %v59
    // Predicated region
    $region18: #{tpu_custom_call.1} parent=1 // pred_check
      _
    $region19: #{tpu_custom_call.1} parent=1 // pred_check_branch
      %69 = sbr.rel (0) target = $region21
    $region20: #{tpu_custom_call.1} parent=1 // pred_region
      %s71 = ssub.s32 1024, 1024
      %72 = vsyncadd [#allocation4], %s71
      %s74 = sshll.u32 [#allocation7], 4
      %s75 = int_to_ptr.vmem [resolvable:$true] %s74
      %77 = dma.vmem_to_hbm [thread:$0]  %s75, 1024, %s2, [#allocation4]
    $region21: #{tpu_custom_call.1} parent=1 // pred_fallthru
      _
    // Predicated region
    $region22: #{tpu_custom_call.1} parent=1 // pred_check
      _
    $region23: #{tpu_custom_call.1} parent=1 // pred_check_branch
      %79 = sbr.rel (0) target = $region25
    $region24: #{tpu_custom_call.1} parent=1 // pred_region
      %80 = dma.done [#allocation4], 1024
    $region25: #{tpu_custom_call.1} parent=1 // pred_fallthru
      _
    %81 = vsyncpa [#allocation3], 1
    %82 = vsyncpa [#allocation6], 1
    %83 = vsyncpa [#allocation4], 1

</llo_original>
